<compile_context>
chip_gen: v6e
topology: v6e:2x2x1
jax: 0.10.0
libtpu: 0.0.40
codegen_flags: <defaults>
</compile_context>

<pallas_src>
import jax
import jax.numpy as jnp
from jax.experimental import pallas as pl
from jax.experimental.pallas import tpu as pltpu


def _mle_loss_kernel(predict_ref, label_ref, out_ref, acc_ref):
    """Grid = (N-blocks, C-blocks); axis 1 (C) is the reduction axis.

    predict_ref: (TM, TC) native dtype (f32 / bf16 ...)
    label_ref:   (TM, 1)  int32
    out_ref:     (8, OUT_LANES) f32  -- per-N-block partial sums (lane-dense)
    acc_ref:     (8, TC)  f32 VMEM scratch (persists over the C-steps)
    """
    j = pl.program_id(1)
    nj = pl.num_programs(1)
    tm, tc = predict_ref.shape
    out_lanes = out_ref.shape[-1]

    @pl.when(j == 0)
    def _init():
        acc_ref[...] = jnp.zeros_like(acc_ref)

    labels = label_ref[...]                                           # (TM, 1) int32
    # (1, TC) class-id row for this C tile; broadcast over sublanes is free.
    col = jax.lax.broadcasted_iota(jnp.int32, (1, tc), 1) + j * tc    # (1, TC)

    # Fold the TM rows into 8 sublanes with pure elementwise VPU work:
    #   - compare + select stay in the input dtype (<=1 nonzero per row, so
    #     no precision issue within a row),
    #   - the f32 cast is fused into the cross-row accumulate (required for
    #     exactness with bf16 inputs).
    folded = jnp.zeros((8, tc), jnp.float32)
    for r in range(0, tm, 8):
        lab = labels[r:r + 8, :]                                      # (8, 1)
        blk = predict_ref[r:r + 8, :]                                 # (8, TC) native
        hit = jnp.where(col == lab, blk, jnp.zeros_like(blk))         # native dtype
        folded = folded + hit.astype(jnp.float32)
    acc_ref[...] += folded                                            # (8, TC) f32

    @pl.when(j == nj - 1)
    def _finalize():
        a = acc_ref[...]
        if out_lanes == tc:
            out_ref[...] = a
        else:
            # tc is a multiple of out_lanes (=128) on this path: fold lane
            # blocks once per N-block (a few vreg adds, negligible).
            red = a[:, 0:out_lanes]
            for b in range(1, tc // out_lanes):
                red = red + a[:, b * out_lanes:(b + 1) * out_lanes]
            out_ref[...] = red


def _round_up(x: int, m: int) -> int:
    return ((x + m - 1) // m) * m


def mle_loss(predict: jax.Array, label: jax.Array, *,
             tm_max: int = 512, tc_max: int = 2048) -> jax.Array:
    """Pallas implementation of MLELoss.forward.

    predict: (N, C) float (f32 or bf16; kept in native dtype through HBM->VMEM)
    label:   (N,)   int   (class indices in [0, C))
    returns: scalar float32

    Default tiles (512 x 2048) fit the default scoped VMEM on v5e / v6e / v7x
    with double buffering (~8.3 MiB for f32), so no vmem_limit_bytes is set.
    """
    n, c = predict.shape
    label2d = label.reshape(n, 1).astype(jnp.int32)

    # --- C tiling: block last dim must be a multiple of 128 or the full dim.
    if c <= tc_max:
        tc, c_pad = c, c                     # full-extent C block
    else:
        tc = tc_max                          # multiple of 128
        c_pad = _round_up(c, tc)

    # --- N tiling: always a multiple of 8; prefer >= 2 N blocks so the
    # "parallel" axis shards across both v7x TensorCores (megacore on others).
    n8 = _round_up(n, 8)
    if n8 <= tm_max:
        tm = _round_up(pl.cdiv(n8, 2), 8) if n8 >= 16 else n8
    else:
        tm = tm_max                          # multiple of 8
    n_pad = _round_up(n8, tm)

    if (n_pad, c_pad) != (n, c):
        # Zero-padded rows/cols contribute exactly 0 to the gathered sum
        # (padded labels are 0 and point at zeroed predict rows).
        predict = jnp.pad(predict, ((0, n_pad - n), (0, c_pad - c)))
        label2d = jnp.pad(label2d, ((0, n_pad - n), (0, 0)))

    n_blocks = n_pad // tm
    c_blocks = c_pad // tc
    out_lanes = 128 if (tc % 128 == 0) else tc   # lane-dense output when possible

    cost = pl.CostEstimate(
        flops=int(3 * n_pad * c_pad),            # compare + select + add (no matmul)
        transcendentals=0,
        bytes_accessed=int(n_pad * c_pad * predict.dtype.itemsize
                           + n_pad * 4 + n_blocks * 8 * out_lanes * 4),
    )

    out = pl.pallas_call(
        _mle_loss_kernel,
        out_shape=jax.ShapeDtypeStruct((n_blocks * 8, out_lanes), jnp.float32),
        grid_spec=pltpu.PrefetchScalarGridSpec(
            num_scalar_prefetch=0,
            grid=(n_blocks, c_blocks),
            in_specs=[
                pl.BlockSpec((tm, tc), lambda i, j: (i, j)),   # predict tile
                pl.BlockSpec((tm, 1), lambda i, j: (i, 0)),    # labels for N tile
            ],
            out_specs=pl.BlockSpec((8, out_lanes), lambda i, j: (i, 0)),
            scratch_shapes=[pltpu.VMEM((8, tc), jnp.float32)],
        ),
        compiler_params=pltpu.CompilerParams(
            dimension_semantics=("parallel", "arbitrary")),
        cost_estimate=cost,
    )(predict, label2d)

    # Every entry of `out` is a partial sum (padding contributes exactly 0);
    # divide by the TRUE N.
    return jnp.sum(out) / jnp.float32(n)


if __name__ == "__main__":
    key = jax.random.PRNGKey(0)
    k1, k2, k3, k4, k5, k6 = jax.random.split(key, 6)

    # Case 1: shapes the module implies (batch=8, 16 classes) -- single tile.
    N1, C1 = 8, 16
    p1 = jax.random.normal(k1, (N1, C1), dtype=jnp.float32)
    l1 = jax.random.randint(k2, (N1,), 0, C1, dtype=jnp.int32)
    loss1 = mle_loss(p1, l1)
    jax.block_until_ready(loss1)
    ref1 = jnp.sum(p1[jnp.arange(N1), l1]) / N1
    assert jnp.allclose(loss1, ref1, rtol=1e-5, atol=1e-6), (loss1, ref1)

    # Case 2: bf16, forces the tiled/pipelined multi-block path with padding
    # (grid=(5,3): N 70->80 with tm=16, C 300->384 with tc=128).
    N2, C2 = 70, 300
    p2 = jax.random.normal(k3, (N2, C2), dtype=jnp.bfloat16)
    l2 = jax.random.randint(k4, (N2,), 0, C2, dtype=jnp.int32)
    loss2 = mle_loss(p2, l2, tm_max=16, tc_max=128)
    jax.block_until_ready(loss2)
    ref2 = jnp.sum(p2[jnp.arange(N2), l2].astype(jnp.float32)) / N2
    assert jnp.allclose(loss2, ref2, rtol=1e-3, atol=1e-3), (loss2, ref2)

    # Case 3: f32, exercises the automatic 2-N-block split (tm=24, N 40->48)
    # and the lane-fold finalize (tc=256 -> 128 output lanes), grid=(2,3).
    N3, C3 = 40, 640
    p3 = jax.random.normal(k5, (N3, C3), dtype=jnp.float32)
    l3 = jax.random.randint(k6, (N3,), 0, C3, dtype=jnp.int32)
    loss3 = mle_loss(p3, l3, tc_max=256)
    jax.block_until_ready(loss3)
    ref3 = jnp.sum(p3[jnp.arange(N3), l3]) / N3
    assert jnp.allclose(loss3, ref3, rtol=1e-5, atol=1e-6), (loss3, ref3)

    print("KERNEL_OK")
</pallas_src>

<mosaic_0001>
module attributes {stable_mosaic.version = 11 : i64} {
  func.func @_mle_loss_kernel(%arg0: i32, %arg1: i32, %arg2: memref<8x16xf32, #tpu.memory_space<vmem>>, %arg3: memref<8x1xi32, #tpu.memory_space<vmem>>, %arg4: memref<8x16xf32, #tpu.memory_space<vmem>>, %arg5: memref<8x16xf32, #tpu.memory_space<vmem>>) attributes {dimension_semantics = [#tpu.dimension_semantics<parallel>, #tpu.dimension_semantics<arbitrary>], iteration_bounds = array<i64: 1, 1>, scalar_prefetch = 0 : i64, scratch_operands = 1 : i64, tpu.core_type = #tpu.core_type<tc>, window_params = [{transform_indices = @transform_0, window_bounds = array<i64: 8, 16>}, {transform_indices = @transform_1, window_bounds = array<i64: 8, 1>}, {transform_indices = @transform_2, window_bounds = array<i64: 8, 16>}]} {
    %c0_i32 = arith.constant 0 : i32
    %0 = arith.cmpi eq, %arg1, %c0_i32 : i32
    %1 = arith.extui %0 : i1 to i32
    %c0_i32_0 = arith.constant 0 : i32
    %2 = arith.cmpi ne, %1, %c0_i32_0 : i32
    scf.if %2 {
      %cst_11 = arith.constant 0.000000e+00 : f32
      %22 = vector.broadcast %cst_11 : f32 to vector<8x16xf32>
      %c0_12 = arith.constant 0 : index
      %c0_13 = arith.constant 0 : index
      %23 = vector.load %arg5[%c0_12, %c0_13] : memref<8x16xf32, #tpu.memory_space<vmem>>, vector<8x16xf32>
      tpu.vector_store %arg5[%c0_12, %c0_13], %22 {strides = array<i32>} : memref<8x16xf32, #tpu.memory_space<vmem>>, vector<8x16xf32>,
    } else {
    }
    %c0 = arith.constant 0 : index
    %c0_1 = arith.constant 0 : index
    %3 = vector.load %arg3[%c0, %c0_1] : memref<8x1xi32, #tpu.memory_space<vmem>>, vector<8x1xi32>
    %4 = tpu.iota {dimensions = array<i32: 1>} : vector<1x16xi32>
    %c16_i32 = arith.constant 16 : i32
    %5 = arith.muli %arg1, %c16_i32 : i32
    %6 = vector.broadcast %5 : i32 to vector<1x16xi32>
    %7 = arith.addi %4, %6 : vector<1x16xi32>
    %cst = arith.constant 0.000000e+00 : f32
    %8 = vector.broadcast %cst : f32 to vector<8x16xf32>
    %c0_2 = arith.constant 0 : index
    %c0_3 = arith.constant 0 : index
    %9 = vector.load %arg2[%c0_2, %c0_3] : memref<8x16xf32, #tpu.memory_space<vmem>>, vector<8x16xf32>
    %10 = vector.broadcast %7 : vector<1x16xi32> to vector<8x16xi32>
    %11 = vector.broadcast %3 : vector<8x1xi32> to vector<8x16xi32>
    %12 = arith.cmpi eq, %10, %11 : vector<8x16xi32>
    %cst_4 = arith.constant 0.000000e+00 : f32
    %13 = vector.broadcast %cst_4 : f32 to vector<8x16xf32>
    %14 = arith.select %12, %9, %13 : vector<8x16xi1>, vector<8x16xf32>
    %15 = arith.addf %8, %14 : vector<8x16xf32>
    %c0_5 = arith.constant 0 : index
    %c0_6 = arith.constant 0 : index
    %16 = vector.load %arg5[%c0_5, %c0_6] : memref<8x16xf32, #tpu.memory_space<vmem>>, vector<8x16xf32>
    %17 = arith.addf %16, %15 : vector<8x16xf32>
    %c0_7 = arith.constant 0 : index
    %c0_8 = arith.constant 0 : index
    %18 = vector.load %arg5[%c0_7, %c0_8] : memref<8x16xf32, #tpu.memory_space<vmem>>, vector<8x16xf32>
    tpu.vector_store %arg5[%c0_7, %c0_8], %17 {strides = array<i32>} : memref<8x16xf32, #tpu.memory_space<vmem>>, vector<8x16xf32>,
    %c0_i32_9 = arith.constant 0 : i32
    %19 = arith.cmpi eq, %arg1, %c0_i32_9 : i32
    %20 = arith.extui %19 : i1 to i32
    %c0_i32_10 = arith.constant 0 : i32
    %21 = arith.cmpi ne, %20, %c0_i32_10 : i32
    scf.if %21 {
      %c0_11 = arith.constant 0 : index
      %c0_12 = arith.constant 0 : index
      %22 = vector.load %arg5[%c0_11, %c0_12] : memref<8x16xf32, #tpu.memory_space<vmem>>, vector<8x16xf32>
      %c0_13 = arith.constant 0 : index
      %c0_14 = arith.constant 0 : index
      %23 = vector.load %arg4[%c0_13, %c0_14] : memref<8x16xf32, #tpu.memory_space<vmem>>, vector<8x16xf32>
      tpu.vector_store %arg4[%c0_13, %c0_14], %22 {strides = array<i32>} : memref<8x16xf32, #tpu.memory_space<vmem>>, vector<8x16xf32>,
    } else {
    }
    return
  }
  func.func @transform_0(%arg0: i32, %arg1: i32) -> (i32, i32) {
    %c0_i32 = arith.constant 0 : i32
    return %arg0, %arg1 : i32, i32
  }
  func.func @transform_1(%arg0: i32, %arg1: i32) -> (i32, i32) {
    %c0_i32 = arith.constant 0 : i32
    %c0_i32_0 = arith.constant 0 : i32
    return %arg0, %c0_i32 : i32, i32
  }
  func.func @transform_2(%arg0: i32, %arg1: i32) -> (i32, i32) {
    %c0_i32 = arith.constant 0 : i32
    %c0_i32_0 = arith.constant 0 : i32
    return %arg0, %c0_i32 : i32, i32
  }
}

</mosaic_0001>

<llo_original>
// kernel: tpu_custom_call.1
$region0: #{tpu_custom_call.1}
  #allocation0 [shape = 'u32[]', space=smem, size = 0x4, offset = 0x4, fixed_abs, tag = 'smem constant byte address 0x4 - core index']
  #allocation1 [shape = 'u32[144,128]{1,0:T(1,128)}', space=vmem, size = 0x12000, scoped, tag = 'internal scratch']
  #allocation2 [shape = 'f32[8,16]{1,0:T(8,128)}', space=vmem, size = 0x1000, scoped, tag = 'scratch operand']
  %s0 = inlined_call_operand.vmem [shape: f32[8,16], index: 0, kind: input, shape index: {}]
  %s1 = inlined_call_operand.vmem [shape: s32[8,1], index: 1, kind: input, shape index: {}]
  %s2 = inlined_call_operand.hbm [shape: f32[8,16], index: 2, kind: output, shape index: {}]
  %s3 = sld [smem:[#allocation0]]
  $region26: #{tpu_custom_call.1} parent=0
    _
  %s5 = ssub.s32 1, %s3
  %s6 = scalar_select 0, %s5, %s3
  $region1: #{tpu_custom_call.1} parent=0
    #allocation3 [shape = 'u8[4096]{0}', space=vmem, size = 0x1000, scoped, tag = 'output window, operand 0, single buffered']
    #allocation4 [shape = 's32[1]{0}', space=sflag, size = 0x4, scoped, tag = 'scoped memory for tpu_custom_call.1']
    %7 = vsyncpa [#allocation4], 0
    // Predicated region
    $region2: #{tpu_custom_call.1} parent=1 // pred_check
      _
    $region3: #{tpu_custom_call.1} parent=1 // pred_check_branch
      %9 = sbr.rel (0) target = $region5
    $region4: #{tpu_custom_call.1} parent=1 // pred_region
      _
    $region5: #{tpu_custom_call.1} parent=1 // pred_fallthru
      _
    // Predicated region
    $region6: #{tpu_custom_call.1} parent=1 // pred_check
      _
    $region7: #{tpu_custom_call.1} parent=1 // pred_check_branch
      %11 = sbr.rel (0) target = $region9
    $region8: #{tpu_custom_call.1} parent=1 // pred_region
      _
    $region9: #{tpu_custom_call.1} parent=1 // pred_fallthru
      _
    %p12 = scmp.eq.s32.totalorder 0, 0
    // Predicated region
    $region10: #{tpu_custom_call.1} parent=1 // pred_check
      %p13 = pneg %p12
    $region11: #{tpu_custom_call.1} parent=1 // pred_check_branch
      %15 = sbr.rel (%p13) target = $region13
    $region12: #{tpu_custom_call.1} parent=1 // pred_region
      %vm16 = vcmask 130048
      %17 = vst.msk [vmem:[#allocation2] sm:$0xff] %vm16, 0.0
    $region13: #{tpu_custom_call.1} parent=1 // pred_fallthru
      _
    %v18 = vld [vmem:[%s1] sm:$0xff]
    %v19 = vlaneseq
    %v20 = vand.u32 %v19, 127
    %s21 = smul.u32 0, 16
    %v22 = vstv %s21
    %v23 = vadd.s32 %v20, %v22
    %v24 = vld [vmem:[%s0] sm:$0xff]
    %25 = vset.pattern.permute.xlu0 0
    %26 = vperm.xlu0 %25, %v18
    %v27 = vpop.permute.xlu0 %26
    %vm28 = vcmp.eq.s32.totalorder %v23, %v27
    %v29 = vsel %vm28, %v24, 0.0
    %v30 = vadd.f32 %v29, 0.0
    %v31 = vld [vmem:[#allocation2] sm:$0xff]
    %v32 = vadd.f32 %v31, %v30
    %vm33 = vcmask 130048
    %34 = vst.msk [vmem:[#allocation2] sm:$0xff] %vm33, %v32
    // Predicated region
    $region14: #{tpu_custom_call.1} parent=1 // pred_check
      %p35 = pneg %p12
    $region15: #{tpu_custom_call.1} parent=1 // pred_check_branch
      %37 = sbr.rel (%p35) target = $region17
    $region16: #{tpu_custom_call.1} parent=1 // pred_region
      %v38 = vld [vmem:[#allocation2] sm:$0xff]
      %39 = vst.msk [vmem:[#allocation3] sm:$0xff] %vm33, %v38
    $region17: #{tpu_custom_call.1} parent=1 // pred_fallthru
      _
    // Predicated region
    $region18: #{tpu_custom_call.1} parent=1 // pred_check
      _
    $region19: #{tpu_custom_call.1} parent=1 // pred_check_branch
      %41 = sbr.rel (0) target = $region21
    $region20: #{tpu_custom_call.1} parent=1 // pred_region
      %s43 = ssub.s32 128, 128
      %44 = vsyncadd [#allocation4], %s43
      %s46 = sshll.u32 [#allocation3], 4
      %s47 = int_to_ptr.vmem [resolvable:$true] %s46
      %49 = dma.vmem_to_hbm [thread:$0]  %s47, 128, %s2, [#allocation4]
    $region21: #{tpu_custom_call.1} parent=1 // pred_fallthru
      _
    // Predicated region
    $region22: #{tpu_custom_call.1} parent=1 // pred_check
      _
    $region23: #{tpu_custom_call.1} parent=1 // pred_check_branch
      %51 = sbr.rel (0) target = $region25
    $region24: #{tpu_custom_call.1} parent=1 // pred_region
      %52 = dma.done [#allocation4], 128
    $region25: #{tpu_custom_call.1} parent=1 // pred_fallthru
      _
    %53 = vsyncpa [#allocation4], 1

</llo_original>
